<compile_context>
chip_gen: v6e
topology: v6e:2x2x1
jax: 0.10.0
libtpu: 0.0.40
codegen_flags: <defaults>
</compile_context>

<pallas_src>
import functools

import jax
import jax.numpy as jnp
from jax.experimental import pallas as pl
from jax.experimental.pallas import tpu as pltpu

_LANES = 128
_TARGET_BLOCK_BYTES = 4 * 1024 * 1024   # per-input VMEM block (double-buffered)


def _dice_partials_kernel(logit_ref, targ_ref, out_ref, *, rows_last, n_tiles):
    """Reduce one (block_rows, 128) tile to three 128-lane partial sums."""
    x = logit_ref[...].astype(jnp.float32)
    t = targ_ref[...].astype(jnp.float32)
    p = jax.nn.sigmoid(x)                      # EUP; free slot next to VPU adds

    if rows_last is not None:
        # Last grid step owns a boundary tile: rows >= rows_last hold
        # unspecified data -> select them away (where, not multiply, so NaNs
        # in the padding cannot poison the sums).
        i = pl.program_id(0)
        valid_rows = jnp.where(i == n_tiles - 1, rows_last, x.shape[0])
        row_idx = jax.lax.broadcasted_iota(jnp.int32, x.shape, 0)
        keep = row_idx < valid_rows
        p = jnp.where(keep, p, 0.0)
        t = jnp.where(keep, t, 0.0)

    out_ref[:, 0, :] = jnp.sum(p * t, axis=0, keepdims=True)   # sum(p*t) per lane
    out_ref[:, 1, :] = jnp.sum(p, axis=0, keepdims=True)       # sum(p)   per lane
    out_ref[:, 2, :] = jnp.sum(t, axis=0, keepdims=True)       # sum(t)   per lane


def _pick_block_rows(m: int, max_rows: int):
    """Choose (block_rows, n_tiles, rows_last).  Prefer an exact divisor of m
    (no tail masking) while keeping blocks big; else mask the last tile."""
    if m <= max_rows:
        return m, 1, None
    # Search multiples of 8 in [max_rows/2, max_rows] that divide m exactly.
    for cand in range(max_rows, max(8, max_rows // 2) - 1, -8):
        if cand > 0 and m % cand == 0:
            return cand, m // cand, None
    block_rows = max_rows
    n_tiles = pl.cdiv(m, block_rows)
    tail = m % block_rows
    return block_rows, n_tiles, (tail if tail else None)


def dice_loss(logits: jax.Array, targets: jax.Array, eps: float = 1e-09) -> jax.Array:
    """Pallas TPU implementation of DiceLoss.forward. Returns a scalar f32."""
    assert logits.shape == targets.shape

    lf = logits.reshape(-1)
    tf = targets.reshape(-1)
    if not jnp.issubdtype(lf.dtype, jnp.floating):
        lf = lf.astype(jnp.float32)            # corner case: integer logits
    if not jnp.issubdtype(tf.dtype, jnp.floating):
        tf = tf.astype(jnp.float32)            # corner case: bool/int targets

    total = lf.shape[0]
    rem = total % _LANES
    if rem:
        # Rare path: element count not lane-aligned.  Pad the tail only, in
        # native dtype: sigmoid(finfo.min) == 0 and target pad == 0, so all
        # three global sums are unchanged.
        pad = _LANES - rem
        lf = jnp.concatenate(
            [lf, jnp.full((pad,), jnp.finfo(lf.dtype).min, lf.dtype)])
        tf = jnp.concatenate([tf, jnp.zeros((pad,), tf.dtype)])

    m = lf.shape[0] // _LANES
    lf = lf.reshape(m, _LANES)
    tf = tf.reshape(m, _LANES)

    # Byte-budget driven tile size (sublane aligned), dtype aware.
    itemsize = max(jnp.dtype(lf.dtype).itemsize, jnp.dtype(tf.dtype).itemsize)
    max_rows = max(8, (_TARGET_BLOCK_BYTES // (_LANES * itemsize)) // 8 * 8)
    block_rows, n_tiles, rows_last = _pick_block_rows(m, max_rows)

    kernel = functools.partial(_dice_partials_kernel,
                               rows_last=rows_last, n_tiles=n_tiles)

    partials = pl.pallas_call(
        kernel,
        out_shape=jax.ShapeDtypeStruct((n_tiles, 3, _LANES), jnp.float32),
        grid_spec=pltpu.PrefetchScalarGridSpec(
            num_scalar_prefetch=0,
            grid=(n_tiles,),
            in_specs=[
                pl.BlockSpec((block_rows, _LANES), lambda i: (i, 0)),
                pl.BlockSpec((block_rows, _LANES), lambda i: (i, 0)),
            ],
            out_specs=pl.BlockSpec((1, 3, _LANES), lambda i: (i, 0, 0)),
        ),
        compiler_params=pltpu.CompilerParams(
            # Tiles are independent -> shard across both TCs on v7x.
            dimension_semantics=("parallel",),
            # ~16 MiB of double-buffered input blocks + tiny outputs; 32 MiB
            # is safe on all of v5e / v6e / v7x.
            vmem_limit_bytes=32 * 1024 * 1024,
        ),
    )(lf, tf)

    # Tiny epilogue: combine lane/tile partials and form the scalar loss.
    sums = jnp.sum(partials, axis=(0, 2))       # [sum(p*t), sum(p), sum(t)]
    intersection = 2.0 * sums[0]
    union = sums[1] + sums[2]                   # matches PyTorch: eps only in numerator
    dice_score = (intersection + eps) / union
    return 1.0 - dice_score


def dice_loss_ref(logits, targets, eps=1e-09):
    num = targets.shape[0]
    p = jax.nn.sigmoid(logits.astype(jnp.float32)).reshape(num, -1)
    t = targets.astype(jnp.float32).reshape(num, -1)
    intersection = 2.0 * jnp.sum(p * t)
    union = jnp.sum(p) + jnp.sum(t)
    return 1.0 - (intersection + eps) / union


if __name__ == "__main__":
    key = jax.random.PRNGKey(0)
    k1, k2 = jax.random.split(key)
    # NCHW like the PyTorch module: batch=2, channels=4, spatial=16x16
    logits = jax.random.normal(k1, (2, 4, 16, 16), dtype=jnp.float32)
    targets = (jax.random.uniform(k2, (2, 4, 16, 16)) > 0.5).astype(jnp.float32)

    loss = jax.block_until_ready(dice_loss(logits, targets))
    ref = jax.block_until_ready(dice_loss_ref(logits, targets))
    assert jnp.allclose(loss, ref, atol=1e-5, rtol=1e-5), (loss, ref)
    print("KERNEL_OK")
</pallas_src>

<mosaic_0001>
module attributes {stable_mosaic.version = 11 : i64} {
  func.func @_dice_partials_kernel(%arg0: i32, %arg1: memref<16x128xf32, #tpu.memory_space<vmem>>, %arg2: memref<16x128xf32, #tpu.memory_space<vmem>>, %arg3: memref<1x3x128xf32, #tpu.memory_space<vmem>>) attributes {dimension_semantics = [#tpu.dimension_semantics<parallel>], iteration_bounds = array<i64: 1>, scalar_prefetch = 0 : i64, scratch_operands = 0 : i64, tpu.core_type = #tpu.core_type<tc>, window_params = [{transform_indices = @transform_0, window_bounds = array<i64: 16, 128>}, {transform_indices = @transform_1, window_bounds = array<i64: 16, 128>}, {transform_indices = @transform_2, window_bounds = array<i64: 1, 3, 128>}]} {
    %c0 = arith.constant 0 : index
    %c0_0 = arith.constant 0 : index
    %0 = vector.load %arg1[%c0, %c0_0] : memref<16x128xf32, #tpu.memory_space<vmem>>, vector<16x128xf32>
    %c0_1 = arith.constant 0 : index
    %c0_2 = arith.constant 0 : index
    %1 = vector.load %arg2[%c0_1, %c0_2] : memref<16x128xf32, #tpu.memory_space<vmem>>, vector<16x128xf32>
    %2 = arith.negf %0 : vector<16x128xf32>
    %3 = math.exp %2 : vector<16x128xf32>
    %cst = arith.constant 1.000000e+00 : f32
    %4 = vector.broadcast %cst : f32 to vector<16x128xf32>
    %5 = arith.addf %4, %3 : vector<16x128xf32>
    %6 = arith.divf %4, %5 : vector<16x128xf32>
    %7 = arith.mulf %6, %1 : vector<16x128xf32>
    %cst_3 = arith.constant dense<0.000000e+00> : vector<128xf32>
    %8 = vector.multi_reduction <add>, %7, %cst_3 [0] : vector<16x128xf32> to vector<128xf32>
    %9 = vector.shape_cast %8 : vector<128xf32> to vector<1x128xf32>
    %c0_4 = arith.constant 0 : index
    %c0_5 = arith.constant 0 : index
    %c0_6 = arith.constant 0 : index
    %10 = vector.load %arg3[%c0_4, %c0_5, %c0_6] : memref<1x3x128xf32, #tpu.memory_space<vmem>>, vector<1x1x128xf32>
    %11 = vector.shape_cast %10 : vector<1x1x128xf32> to vector<1x128xf32>
    %12 = vector.shape_cast %9 : vector<1x128xf32> to vector<1x1x128xf32>
    tpu.vector_store %arg3[%c0_4, %c0_5, %c0_6], %12 {strides = array<i32>} : memref<1x3x128xf32, #tpu.memory_space<vmem>>, vector<1x1x128xf32>,
    %cst_7 = arith.constant dense<0.000000e+00> : vector<128xf32>
    %13 = vector.multi_reduction <add>, %6, %cst_7 [0] : vector<16x128xf32> to vector<128xf32>
    %14 = vector.shape_cast %13 : vector<128xf32> to vector<1x128xf32>
    %c0_8 = arith.constant 0 : index
    %c1 = arith.constant 1 : index
    %c0_9 = arith.constant 0 : index
    %15 = vector.load %arg3[%c0_8, %c1, %c0_9] : memref<1x3x128xf32, #tpu.memory_space<vmem>>, vector<1x1x128xf32>
    %16 = vector.shape_cast %15 : vector<1x1x128xf32> to vector<1x128xf32>
    %17 = vector.shape_cast %14 : vector<1x128xf32> to vector<1x1x128xf32>
    tpu.vector_store %arg3[%c0_8, %c1, %c0_9], %17 {strides = array<i32>} : memref<1x3x128xf32, #tpu.memory_space<vmem>>, vector<1x1x128xf32>,
    %cst_10 = arith.constant dense<0.000000e+00> : vector<128xf32>
    %18 = vector.multi_reduction <add>, %1, %cst_10 [0] : vector<16x128xf32> to vector<128xf32>
    %19 = vector.shape_cast %18 : vector<128xf32> to vector<1x128xf32>
    %c0_11 = arith.constant 0 : index
    %c2 = arith.constant 2 : index
    %c0_12 = arith.constant 0 : index
    %20 = vector.load %arg3[%c0_11, %c2, %c0_12] : memref<1x3x128xf32, #tpu.memory_space<vmem>>, vector<1x1x128xf32>
    %21 = vector.shape_cast %20 : vector<1x1x128xf32> to vector<1x128xf32>
    %22 = vector.shape_cast %19 : vector<1x128xf32> to vector<1x1x128xf32>
    tpu.vector_store %arg3[%c0_11, %c2, %c0_12], %22 {strides = array<i32>} : memref<1x3x128xf32, #tpu.memory_space<vmem>>, vector<1x1x128xf32>,
    return
  }
  func.func @transform_0(%arg0: i32) -> (i32, i32) {
    %c0_i32 = arith.constant 0 : i32
    %c0_i32_0 = arith.constant 0 : i32
    return %arg0, %c0_i32 : i32, i32
  }
  func.func @transform_1(%arg0: i32) -> (i32, i32) {
    %c0_i32 = arith.constant 0 : i32
    %c0_i32_0 = arith.constant 0 : i32
    return %arg0, %c0_i32 : i32, i32
  }
  func.func @transform_2(%arg0: i32) -> (i32, i32, i32) {
    %c0_i32 = arith.constant 0 : i32
    %c0_i32_0 = arith.constant 0 : i32
    %c0_i32_1 = arith.constant 0 : i32
    return %arg0, %c0_i32, %c0_i32_0 : i32, i32, i32
  }
}

</mosaic_0001>

<llo_original>
// kernel: tpu_custom_call.1
$region0: #{tpu_custom_call.1}
  #allocation0 [shape = 'u32[]', space=smem, size = 0x4, offset = 0x4, fixed_abs, tag = 'smem constant byte address 0x4 - core index']
  #allocation1 [shape = 'u32[144,128]{1,0:T(1,128)}', space=vmem, size = 0x12000, scoped, tag = 'internal scratch']
  %s0 = inlined_call_operand.hbm [shape: f32[16,128], index: 0, kind: input, shape index: {}]
  %s1 = inlined_call_operand.hbm [shape: f32[16,128], index: 1, kind: input, shape index: {}]
  %s2 = inlined_call_operand.vmem [shape: f32[1,3,128], index: 2, kind: output, shape index: {}]
  %s3 = sld [smem:[#allocation0]]
  $region26: #{tpu_custom_call.1} parent=0
    _
  %s5 = ssub.s32 1, %s3
  %s6 = scalar_select 0, %s5, %s3
  $region1: #{tpu_custom_call.1} parent=0
    #allocation2 [shape = 'u8[8192]{0}', space=vmem, size = 0x2000, scoped, tag = 'input window, operand 0, single buffered']
    #allocation3 [shape = 's32[1]{0}', space=sflag, size = 0x4, scoped, tag = 'scoped memory for tpu_custom_call.1']
    #allocation4 [shape = 'u8[8192]{0}', space=vmem, size = 0x2000, scoped, tag = 'input window, operand 1, single buffered']
    #allocation5 [shape = 's32[1]{0}', space=sflag, size = 0x4, scoped, tag = 'scoped memory for tpu_custom_call.1']
    %7 = vsyncpa [#allocation3], 0
    %8 = vsyncpa [#allocation5], 0
    // Predicated region
    $region2: #{tpu_custom_call.1} parent=1 // pred_check
      _
    $region3: #{tpu_custom_call.1} parent=1 // pred_check_branch
      %10 = sbr.rel (0) target = $region5
    $region4: #{tpu_custom_call.1} parent=1 // pred_region
      %s12 = ssub.s32 256, 256
      %13 = vsyncadd [#allocation3], %s12
      %s14 = sshll.u32 [#allocation2], 4
      %s15 = int_to_ptr.vmem [resolvable:$true] %s14
      %20 = dma.hbm_to_vmem [thread:$0]  %s0, 256, %s15, [#allocation3], 128, 128, 8
    $region5: #{tpu_custom_call.1} parent=1 // pred_fallthru
      _
    // Predicated region
    $region6: #{tpu_custom_call.1} parent=1 // pred_check
      _
    $region7: #{tpu_custom_call.1} parent=1 // pred_check_branch
      %22 = sbr.rel (0) target = $region9
    $region8: #{tpu_custom_call.1} parent=1 // pred_region
      %s24 = ssub.s32 256, 256
      %25 = vsyncadd [#allocation5], %s24
      %s26 = sshll.u32 [#allocation4], 4
      %s27 = int_to_ptr.vmem [resolvable:$true] %s26
      %32 = dma.hbm_to_vmem [thread:$0]  %s1, 256, %s27, [#allocation5], 128, 128, 8
    $region9: #{tpu_custom_call.1} parent=1 // pred_fallthru
      _
    // Predicated region
    $region10: #{tpu_custom_call.1} parent=1 // pred_check
      _
    $region11: #{tpu_custom_call.1} parent=1 // pred_check_branch
      %34 = sbr.rel (0) target = $region13
    $region12: #{tpu_custom_call.1} parent=1 // pred_region
      %35 = dma.done [#allocation3], 256
    $region13: #{tpu_custom_call.1} parent=1 // pred_fallthru
      _
    // Predicated region
    $region14: #{tpu_custom_call.1} parent=1 // pred_check
      _
    $region15: #{tpu_custom_call.1} parent=1 // pred_check_branch
      %37 = sbr.rel (0) target = $region17
    $region16: #{tpu_custom_call.1} parent=1 // pred_region
      %38 = dma.done [#allocation5], 256
    $region17: #{tpu_custom_call.1} parent=1 // pred_fallthru
      _
    %v39 = vld [vmem:[#allocation2] sm:$0xff]
    %v40 = vld [vmem:[#allocation2 + $0x8] sm:$0xff]
    %v41 = vld [vmem:[#allocation4] sm:$0xff]
    %v42 = vld [vmem:[#allocation4 + $0x8] sm:$0xff]
    %v43 = vxor.u32 %v39, 2147483648
    %v44 = vxor.u32 %v40, 2147483648
    %v45 = vmul.f32 %v43, 1.442695
    %v46 = vpow.pop %v45
    %v47 = vmul.f32 %v44, 1.442695
    %v48 = vpow.pop %v47
    %v49 = vadd.f32 %v46, 1.0
    %v50 = vadd.f32 %v48, 1.0
    %v51 = vrcp.pop %v49
    %v52 = vmul.f32 1.0, %v51
    %v53 = vrcp.pop %v50
    %v54 = vmul.f32 1.0, %v53
    %v55 = vmul.f32 %v52, %v41
    %v56 = vmul.f32 %v54, %v42
    %v57 = vadd.f32 %v55, %v56
    %v58 = vrot.slane %v57, 4
    %v59 = vadd.f32 %v57, %v58
    %v60 = vrot.slane %v59, 2
    %v61 = vadd.f32 %v59, %v60
    %v62 = vrot.slane %v61, 1
    %v63 = vadd.f32 %v61, %v62
    %64 = vst [vmem:[%s2] sm:$0x1] %v63
    %v65 = vadd.f32 %v52, %v54
    %v66 = vrot.slane %v65, 4
    %v67 = vadd.f32 %v65, %v66
    %v68 = vrot.slane %v67, 2
    %v69 = vadd.f32 %v67, %v68
    %v70 = vrot.slane %v69, 1
    %v71 = vadd.f32 %v69, %v70
    %72 = vst [vmem:[%s2 + $0x1] sm:$0x1] %v71
    %v73 = vadd.f32 %v41, %v42
    %v74 = vrot.slane %v73, 4
    %v75 = vadd.f32 %v73, %v74
    %v76 = vrot.slane %v75, 2
    %v77 = vadd.f32 %v75, %v76
    %v78 = vrot.slane %v77, 1
    %v79 = vadd.f32 %v77, %v78
    %80 = vst [vmem:[%s2 + $0x2] sm:$0x1] %v79
    // Predicated region
    $region18: #{tpu_custom_call.1} parent=1 // pred_check
      _
    $region19: #{tpu_custom_call.1} parent=1 // pred_check_branch
      %82 = sbr.rel (0) target = $region21
    $region20: #{tpu_custom_call.1} parent=1 // pred_region
      _
    $region21: #{tpu_custom_call.1} parent=1 // pred_fallthru
      _
    // Predicated region
    $region22: #{tpu_custom_call.1} parent=1 // pred_check
      _
    $region23: #{tpu_custom_call.1} parent=1 // pred_check_branch
      %84 = sbr.rel (0) target = $region25
    $region24: #{tpu_custom_call.1} parent=1 // pred_region
      _
    $region25: #{tpu_custom_call.1} parent=1 // pred_fallthru
      _
    %85 = vsyncpa [#allocation3], 1
    %86 = vsyncpa [#allocation5], 1

</llo_original>
